<compile_context>
chip_gen: v7x
topology: tpu7x:2x2x1
jax: 0.10.0
libtpu: 0.0.40
codegen_flags: <defaults>
</compile_context>

<pallas_src>
import jax
import jax.numpy as jnp
from jax.experimental import pallas as pl
from jax.experimental.pallas import tpu as pltpu


def fingerprint_kernel(x_ref, w1_ref, st1_ref, w2_ref, st2_ref, o_ref):
    # fc1 (bf16 MXU, f32 accumulate) + fused BN1 + ReLU
    h = jnp.dot(x_ref[...].astype(jnp.bfloat16), w1_ref[...],
                preferred_element_type=jnp.float32)
    h = h * st1_ref[0:1, :] + st1_ref[1:2, :]
    h = jnp.maximum(h, 0.0)
    # fc2 (bf16 MXU, f32 accumulate) + fused BN2 + ReLU
    o = jnp.dot(h.astype(jnp.bfloat16), w2_ref[...],
                preferred_element_type=jnp.float32)
    o = o * st2_ref[0:1, :] + st2_ref[1:2, :]
    o_ref[...] = jnp.maximum(o, 0.0).astype(o_ref.dtype)


def prepare_params(params, eps=1e-5):
    """One-time fold of Linear bias + BatchNorm1d (eval) into scale/shift,
    and cast of weights to bf16. Call once at load time, reuse per forward."""
    s1 = params["bn1_gamma"] / jnp.sqrt(params["bn1_var"] + eps)
    t1 = (params["b1"] - params["bn1_mean"]) * s1 + params["bn1_beta"]
    s2 = params["bn2_gamma"] / jnp.sqrt(params["bn2_var"] + eps)
    t2 = (params["b2"] - params["bn2_mean"]) * s2 + params["bn2_beta"]
    return {
        "w1": params["w1"].astype(jnp.bfloat16),          # (inp, inp)
        "w2": params["w2"].astype(jnp.bfloat16),          # (inp, 256)
        "st1": jnp.stack([s1, t1]).astype(jnp.float32),   # (2, inp)
        "st2": jnp.stack([s2, t2]).astype(jnp.float32),   # (2, 256)
    }


def fingerprint_forward(x, folded):
    """x: (B, 1, inp) float32 — mirrors PyTorch input that gets .squeeze(1).
    `folded` comes from prepare_params()."""
    B = x.shape[0]
    inp = folded["w1"].shape[0]
    out_dim = folded["w2"].shape[1]
    x2d = x.reshape(B, inp)  # torch: x.squeeze(1)

    # Batch tiling: 256-row tiles fill the v6e/v7x MXU; small batches use one
    # full-batch tile (block equal to full array dim satisfies the tiling rule).
    TB = 256 if B >= 256 else B
    num_tiles = pl.cdiv(B, TB)
    Bp = num_tiles * TB
    if Bp != B:
        x2d = jnp.pad(x2d, ((0, Bp - B), (0, 0)))

    out = pl.pallas_call(
        fingerprint_kernel,
        out_shape=jax.ShapeDtypeStruct((Bp, out_dim), jnp.float32),
        grid=(num_tiles,),
        in_specs=[
            pl.BlockSpec((TB, inp), lambda i: (i, 0)),        # x tile (streams)
            pl.BlockSpec((inp, inp), lambda i: (0, 0)),       # W1 (VMEM-resident)
            pl.BlockSpec((2, inp), lambda i: (0, 0)),         # [scale1; shift1]
            pl.BlockSpec((inp, out_dim), lambda i: (0, 0)),   # W2 (VMEM-resident)
            pl.BlockSpec((2, out_dim), lambda i: (0, 0)),     # [scale2; shift2]
        ],
        out_specs=pl.BlockSpec((TB, out_dim), lambda i: (i, 0)),
        compiler_params=pltpu.CompilerParams(
            dimension_semantics=("parallel",),
            vmem_limit_bytes=8 << 20,
        ),
    )(x2d, folded["w1"], folded["st1"], folded["w2"], folded["st2"])

    # torch.flatten(x, 1) on a 2-D tensor is a no-op; drop batch padding.
    return out[:B]


def init_params(key, inp, out_dim=256):
    ks = jax.random.split(key, 8)
    lim1 = 1.0 / jnp.sqrt(inp)
    return {
        # stored pre-transposed: (in_features, out_features)
        "w1": jax.random.uniform(ks[0], (inp, inp), jnp.float32, -lim1, lim1),
        "b1": jax.random.uniform(ks[1], (inp,), jnp.float32, -lim1, lim1),
        "bn1_gamma": jnp.ones((inp,), jnp.float32),
        "bn1_beta": jnp.zeros((inp,), jnp.float32),
        "bn1_mean": jax.random.normal(ks[2], (inp,), jnp.float32) * 0.1,
        "bn1_var": jnp.abs(jax.random.normal(ks[3], (inp,), jnp.float32)) * 0.5 + 0.5,
        "w2": jax.random.uniform(ks[4], (inp, out_dim), jnp.float32, -lim1, lim1),
        "b2": jax.random.uniform(ks[5], (out_dim,), jnp.float32, -lim1, lim1),
        "bn2_gamma": jnp.ones((out_dim,), jnp.float32),
        "bn2_beta": jnp.zeros((out_dim,), jnp.float32),
        "bn2_mean": jax.random.normal(ks[6], (out_dim,), jnp.float32) * 0.1,
        "bn2_var": jnp.abs(jax.random.normal(ks[7], (out_dim,), jnp.float32)) * 0.5 + 0.5,
    }


def reference_forward(x, params, emulate_bf16_weights=False):
    """Pure-JAX reference mirroring the PyTorch forward (eval mode)."""
    eps = 1e-5
    w1, w2 = params["w1"], params["w2"]
    z = x.reshape(x.shape[0], -1)
    if emulate_bf16_weights:
        z1 = jnp.dot(z.astype(jnp.bfloat16), w1.astype(jnp.bfloat16),
                     preferred_element_type=jnp.float32)
    else:
        z1 = z @ w1
    z1 = z1 + params["b1"]
    z1 = (z1 - params["bn1_mean"]) / jnp.sqrt(params["bn1_var"] + eps)
    z1 = z1 * params["bn1_gamma"] + params["bn1_beta"]
    z1 = jax.nn.relu(z1)
    if emulate_bf16_weights:
        z2 = jnp.dot(z1.astype(jnp.bfloat16), w2.astype(jnp.bfloat16),
                     preferred_element_type=jnp.float32)
    else:
        z2 = z1 @ w2
    z2 = z2 + params["b2"]
    z2 = (z2 - params["bn2_mean"]) / jnp.sqrt(params["bn2_var"] + eps)
    z2 = z2 * params["bn2_gamma"] + params["bn2_beta"]
    return jax.nn.relu(z2)


if __name__ == "__main__":
    key = jax.random.PRNGKey(0)
    kx, kp = jax.random.split(key)

    B, inp = 8, 128  # small shapes; fingerprint slice length = 128
    x = jax.random.normal(kx, (B, 1, inp), jnp.float32)
    params = init_params(kp, inp, out_dim=256)

    folded = prepare_params(params)  # one-time: BN fold + bf16 weight cast
    fwd = jax.jit(fingerprint_forward)

    out = jax.block_until_ready(fwd(x, folded))
    assert out.shape == (B, 256), out.shape

    # Tight check vs. a reference using the same bf16 weight precision.
    ref_bf16 = reference_forward(x, params, emulate_bf16_weights=True)
    assert jnp.allclose(out, ref_bf16, atol=2e-3, rtol=2e-3), \
        float(jnp.max(jnp.abs(out - ref_bf16)))

    # Loose sanity check vs. the full-f32 reference (bf16 weight rounding).
    ref_f32 = reference_forward(x, params, emulate_bf16_weights=False)
    assert jnp.allclose(out, ref_f32, atol=1e-1, rtol=5e-2), \
        float(jnp.max(jnp.abs(out - ref_f32)))

    print("KERNEL_OK")
</pallas_src>

<mosaic_0001>
module attributes {stable_mosaic.version = 11 : i64} {
  func.func @fingerprint_kernel(%arg0: i32, %arg1: memref<8x128xf32, #tpu.memory_space<vmem>>, %arg2: memref<128x128xbf16, #tpu.memory_space<vmem>>, %arg3: memref<2x128xf32, #tpu.memory_space<vmem>>, %arg4: memref<128x256xbf16, #tpu.memory_space<vmem>>, %arg5: memref<2x256xf32, #tpu.memory_space<vmem>>, %arg6: memref<8x256xf32, #tpu.memory_space<vmem>>) attributes {dimension_semantics = [#tpu.dimension_semantics<parallel>], iteration_bounds = array<i64: 1>, scalar_prefetch = 0 : i64, scratch_operands = 0 : i64, tpu.core_type = #tpu.core_type<tc>, window_params = [{transform_indices = @transform_0, window_bounds = array<i64: 8, 128>}, {pipeline_mode = #tpu.pipeline_mode<synchronous>, transform_indices = @transform_1, window_bounds = array<i64: 128, 128>}, {pipeline_mode = #tpu.pipeline_mode<synchronous>, transform_indices = @transform_2, window_bounds = array<i64: 2, 128>}, {pipeline_mode = #tpu.pipeline_mode<synchronous>, transform_indices = @transform_3, window_bounds = array<i64: 128, 256>}, {pipeline_mode = #tpu.pipeline_mode<synchronous>, transform_indices = @transform_4, window_bounds = array<i64: 2, 256>}, {transform_indices = @transform_5, window_bounds = array<i64: 8, 256>}]} {
    %c0 = arith.constant 0 : index
    %c0_0 = arith.constant 0 : index
    %0 = vector.load %arg1[%c0, %c0_0] : memref<8x128xf32, #tpu.memory_space<vmem>>, vector<8x128xf32>
    %1 = arith.truncf %0 : vector<8x128xf32> to vector<8x128xbf16>
    %c0_1 = arith.constant 0 : index
    %c0_2 = arith.constant 0 : index
    %2 = vector.load %arg2[%c0_1, %c0_2] : memref<128x128xbf16, #tpu.memory_space<vmem>>, vector<128x128xbf16>
    %cst = arith.constant dense<0.000000e+00> : vector<8x128xf32>
    %3 = tpu.matmul %1, %2, %cst {dimension_numbers = #tpu.dot_dimension_numbers<[1], [0], [0], [1], [0, 0, 1, 1], [], []>} : vector<8x128xbf16>, vector<128x128xbf16>, vector<8x128xf32> -> vector<8x128xf32>
    %c0_3 = arith.constant 0 : index
    %c0_4 = arith.constant 0 : index
    %4 = vector.load %arg3[%c0_3, %c0_4] : memref<2x128xf32, #tpu.memory_space<vmem>>, vector<1x128xf32>
    %5 = vector.broadcast %4 : vector<1x128xf32> to vector<8x128xf32>
    %6 = arith.mulf %3, %5 : vector<8x128xf32>
    %c1 = arith.constant 1 : index
    %c0_5 = arith.constant 0 : index
    %7 = vector.load %arg3[%c1, %c0_5] : memref<2x128xf32, #tpu.memory_space<vmem>>, vector<1x128xf32>
    %8 = vector.broadcast %7 : vector<1x128xf32> to vector<8x128xf32>
    %9 = arith.addf %6, %8 : vector<8x128xf32>
    %cst_6 = arith.constant 0.000000e+00 : f32
    %10 = vector.broadcast %cst_6 : f32 to vector<8x128xf32>
    %11 = arith.maximumf %9, %10 : vector<8x128xf32>
    %12 = arith.truncf %11 : vector<8x128xf32> to vector<8x128xbf16>
    %c0_7 = arith.constant 0 : index
    %c0_8 = arith.constant 0 : index
    %13 = vector.load %arg4[%c0_7, %c0_8] : memref<128x256xbf16, #tpu.memory_space<vmem>>, vector<128x256xbf16>
    %cst_9 = arith.constant dense<0.000000e+00> : vector<8x256xf32>
    %14 = tpu.matmul %12, %13, %cst_9 {dimension_numbers = #tpu.dot_dimension_numbers<[1], [0], [0], [1], [0, 0, 1, 1], [], []>} : vector<8x128xbf16>, vector<128x256xbf16>, vector<8x256xf32> -> vector<8x256xf32>
    %c0_10 = arith.constant 0 : index
    %c0_11 = arith.constant 0 : index
    %15 = vector.load %arg5[%c0_10, %c0_11] : memref<2x256xf32, #tpu.memory_space<vmem>>, vector<1x256xf32>
    %16 = vector.broadcast %15 : vector<1x256xf32> to vector<8x256xf32>
    %17 = arith.mulf %14, %16 : vector<8x256xf32>
    %c1_12 = arith.constant 1 : index
    %c0_13 = arith.constant 0 : index
    %18 = vector.load %arg5[%c1_12, %c0_13] : memref<2x256xf32, #tpu.memory_space<vmem>>, vector<1x256xf32>
    %19 = vector.broadcast %18 : vector<1x256xf32> to vector<8x256xf32>
    %20 = arith.addf %17, %19 : vector<8x256xf32>
    %cst_14 = arith.constant 0.000000e+00 : f32
    %21 = vector.broadcast %cst_14 : f32 to vector<8x256xf32>
    %22 = arith.maximumf %20, %21 : vector<8x256xf32>
    %c0_15 = arith.constant 0 : index
    %c0_16 = arith.constant 0 : index
    %23 = vector.load %arg6[%c0_15, %c0_16] : memref<8x256xf32, #tpu.memory_space<vmem>>, vector<8x256xf32>
    tpu.vector_store %arg6[%c0_15, %c0_16], %22 {strides = array<i32>} : memref<8x256xf32, #tpu.memory_space<vmem>>, vector<8x256xf32>,
    return
  }
  func.func @transform_0(%arg0: i32) -> (i32, i32) {
    %c0_i32 = arith.constant 0 : i32
    %c0_i32_0 = arith.constant 0 : i32
    return %arg0, %c0_i32 : i32, i32
  }
  func.func @transform_1(%arg0: i32) -> (i32, i32) {
    %c0_i32 = arith.constant 0 : i32
    %c0_i32_0 = arith.constant 0 : i32
    %c0_i32_1 = arith.constant 0 : i32
    return %c0_i32, %c0_i32_0 : i32, i32
  }
  func.func @transform_2(%arg0: i32) -> (i32, i32) {
    %c0_i32 = arith.constant 0 : i32
    %c0_i32_0 = arith.constant 0 : i32
    %c0_i32_1 = arith.constant 0 : i32
    return %c0_i32, %c0_i32_0 : i32, i32
  }
  func.func @transform_3(%arg0: i32) -> (i32, i32) {
    %c0_i32 = arith.constant 0 : i32
    %c0_i32_0 = arith.constant 0 : i32
    %c0_i32_1 = arith.constant 0 : i32
    return %c0_i32, %c0_i32_0 : i32, i32
  }
  func.func @transform_4(%arg0: i32) -> (i32, i32) {
    %c0_i32 = arith.constant 0 : i32
    %c0_i32_0 = arith.constant 0 : i32
    %c0_i32_1 = arith.constant 0 : i32
    return %c0_i32, %c0_i32_0 : i32, i32
  }
  func.func @transform_5(%arg0: i32) -> (i32, i32) {
    %c0_i32 = arith.constant 0 : i32
    %c0_i32_0 = arith.constant 0 : i32
    return %arg0, %c0_i32 : i32, i32
  }
}

</mosaic_0001>

<llo_original>
// kernel: fingerprint_forward.1
$region0: #{fingerprint_forward.1}
  #allocation0 [shape = 'u32[]', space=smem, size = 0x4, offset = 0x4, fixed_abs, tag = 'smem constant byte address 0x4 - core index']
  #allocation1 [shape = 'u32[144,128]{1,0:T(1,128)}', space=vmem, size = 0x12000, scoped, tag = 'internal scratch']
  %s0 = inlined_call_operand.hbm [shape: f32[8,128], index: 0, kind: input, shape index: {}]
  %s1 = inlined_call_operand.hbm [shape: bf16[128,128], index: 1, kind: input, shape index: {}]
  %s2 = inlined_call_operand.vmem [shape: f32[2,128], index: 2, kind: input, shape index: {}]
  %s3 = inlined_call_operand.hbm [shape: bf16[128,256], index: 3, kind: input, shape index: {}]
  %s4 = inlined_call_operand.vmem [shape: f32[2,256], index: 4, kind: input, shape index: {}]
  %s5 = inlined_call_operand.hbm [shape: f32[8,256], index: 5, kind: output, shape index: {}]
  %s6 = sld [smem:[#allocation0]]
  $region42: #{fingerprint_forward.1} parent=0
    _
  %s8 = ssub.s32 1, %s6
  %s9 = scalar_select 0, %s8, %s6
  $region1: #{fingerprint_forward.1} parent=0
    #allocation2 [shape = 'u8[4096]{0}', space=vmem, size = 0x1000, scoped, tag = 'input window, operand 0, single buffered']
    #allocation3 [shape = 's32[1]{0}', space=sflag, size = 0x4, scoped, tag = 'scoped memory for fingerprint_forward.1']
    #allocation4 [shape = 's32[1]{0}', space=sflag, size = 0x4, scoped, tag = 'scoped memory for fingerprint_forward.1']
    #allocation5 [shape = 'u8[32768]{0}', space=vmem, size = 0x8000, scoped, tag = 'input window, operand 1, single buffered']
    #allocation6 [shape = 's32[1]{0}', space=sflag, size = 0x4, scoped, tag = 'scoped memory for fingerprint_forward.1']
    #allocation7 [shape = 'u8[65536]{0}', space=vmem, size = 0x10000, scoped, tag = 'input window, operand 3, single buffered']
    #allocation8 [shape = 'u8[8192]{0}', space=vmem, size = 0x2000, scoped, tag = 'output window, operand 0, single buffered']
    %10 = vsyncpa [#allocation3], 0
    %11 = vsyncpa [#allocation6], 0
    %12 = vsyncpa [#allocation4], 0
    // Predicated region
    $region2: #{fingerprint_forward.1} parent=1 // pred_check
      _
    $region3: #{fingerprint_forward.1} parent=1 // pred_check_branch
      %14 = sbr.rel (0) target = $region5
    $region4: #{fingerprint_forward.1} parent=1 // pred_region
      %s16 = ssub.s32 128, 128
      %17 = vsyncadd [#allocation3], %s16
      %s19 = sshll.u32 [#allocation2], 4
      %s20 = int_to_ptr.vmem [resolvable:$true] %s19
      %22 = dma.hbm_to_vmem [thread:$0]  %s0, 128, %s20, [#allocation3]
    $region5: #{fingerprint_forward.1} parent=1 // pred_fallthru
      _
    // Predicated region
    $region6: #{fingerprint_forward.1} parent=1 // pred_check
      _
    $region7: #{fingerprint_forward.1} parent=1 // pred_check_branch
      %24 = sbr.rel (0) target = $region9
    $region8: #{fingerprint_forward.1} parent=1 // pred_region
      %s26 = ssub.s32 1024, 1024
      %27 = vsyncadd [#allocation6], %s26
      %s28 = sshll.u32 [#allocation5], 4
      %s29 = int_to_ptr.vmem [resolvable:$true] %s28
      %34 = dma.hbm_to_vmem [thread:$0]  %s1, 1024, %s29, [#allocation6], 64, 64, 4
    $region9: #{fingerprint_forward.1} parent=1 // pred_fallthru
      _
    // Predicated region
    $region10: #{fingerprint_forward.1} parent=1 // pred_check
      _
    $region11: #{fingerprint_forward.1} parent=1 // pred_check_branch
      %36 = sbr.rel (0) target = $region13
    $region12: #{fingerprint_forward.1} parent=1 // pred_region
      _
    $region13: #{fingerprint_forward.1} parent=1 // pred_fallthru
      _
    // Predicated region
    $region14: #{fingerprint_forward.1} parent=1 // pred_check
      _
    $region15: #{fingerprint_forward.1} parent=1 // pred_check_branch
      %38 = sbr.rel (0) target = $region17
    $region16: #{fingerprint_forward.1} parent=1 // pred_region
      %s40 = ssub.s32 2048, 2048
      %41 = vsyncadd [#allocation6], %s40
      %s42 = sshll.u32 [#allocation7], 4
      %s43 = int_to_ptr.vmem [resolvable:$true] %s42
      %48 = dma.hbm_to_vmem [thread:$0]  %s3, 2048, %s43, [#allocation6], 128, 128, 8
    $region17: #{fingerprint_forward.1} parent=1 // pred_fallthru
      _
    // Predicated region
    $region18: #{fingerprint_forward.1} parent=1 // pred_check
      _
    $region19: #{fingerprint_forward.1} parent=1 // pred_check_branch
      %50 = sbr.rel (0) target = $region21
    $region20: #{fingerprint_forward.1} parent=1 // pred_region
      _
    $region21: #{fingerprint_forward.1} parent=1 // pred_fallthru
      _
    // Predicated region
    $region22: #{fingerprint_forward.1} parent=1 // pred_check
      _
    $region23: #{fingerprint_forward.1} parent=1 // pred_check_branch
      %52 = sbr.rel (0) target = $region25
    $region24: #{fingerprint_forward.1} parent=1 // pred_region
      %53 = dma.done [#allocation3], 128
    $region25: #{fingerprint_forward.1} parent=1 // pred_fallthru
      _
    // Predicated region
    $region26: #{fingerprint_forward.1} parent=1 // pred_check
      _
    $region27: #{fingerprint_forward.1} parent=1 // pred_check_branch
      %55 = sbr.rel (0) target = $region29
    $region28: #{fingerprint_forward.1} parent=1 // pred_region
      %56 = dma.done [#allocation6], 1024
    $region29: #{fingerprint_forward.1} parent=1 // pred_fallthru
      _
    // Predicated region
    $region30: #{fingerprint_forward.1} parent=1 // pred_check
      _
    $region31: #{fingerprint_forward.1} parent=1 // pred_check_branch
      %58 = sbr.rel (0) target = $region33
    $region32: #{fingerprint_forward.1} parent=1 // pred_region
      %59 = dma.done [#allocation6], 2048
    $region33: #{fingerprint_forward.1} parent=1 // pred_fallthru
      _
    %v61 = vld [vmem:[#allocation2] sm:$0xff]
    %v62 = vpack.c.bf16 %v61, %v61
    %v63 = vld [vmem:[#allocation5] sm:$0xf]
    %v64 = vld [vmem:[#allocation5 + $0x4] sm:$0xf]
    %v65 = vld [vmem:[#allocation5 + $0x8] sm:$0xf]
    %v66 = vld [vmem:[#allocation5 + $0xc] sm:$0xf]
    %v67 = vld [vmem:[#allocation5 + $0x10] sm:$0xf]
    %v68 = vld [vmem:[#allocation5 + $0x14] sm:$0xf]
    %v69 = vld [vmem:[#allocation5 + $0x18] sm:$0xf]
    %v70 = vld [vmem:[#allocation5 + $0x1c] sm:$0xf]
    %v71 = vld [vmem:[#allocation5 + $0x20] sm:$0xf]
    %v72 = vld [vmem:[#allocation5 + $0x24] sm:$0xf]
    %v73 = vld [vmem:[#allocation5 + $0x28] sm:$0xf]
    %v74 = vld [vmem:[#allocation5 + $0x2c] sm:$0xf]
    %v75 = vld [vmem:[#allocation5 + $0x30] sm:$0xf]
    %v76 = vld [vmem:[#allocation5 + $0x34] sm:$0xf]
    %v77 = vld [vmem:[#allocation5 + $0x38] sm:$0xf]
    %v78 = vld [vmem:[#allocation5 + $0x3c] sm:$0xf]
    %v95 = vunpack.c.l.b16 %v63
    %v96 = vunpack.c.l.b16 %v64
    %v97 = vunpack.c.l.b16 %v65
    %v98 = vunpack.c.l.b16 %v66
    %v99 = vunpack.c.l.b16 %v67
    %v100 = vunpack.c.l.b16 %v68
    %v101 = vunpack.c.l.b16 %v69
    %v102 = vunpack.c.l.b16 %v70
    %v103 = vunpack.c.l.b16 %v71
    %v104 = vunpack.c.l.b16 %v72
    %v105 = vunpack.c.l.b16 %v73
    %v106 = vunpack.c.l.b16 %v74
    %v107 = vunpack.c.l.b16 %v75
    %v108 = vunpack.c.l.b16 %v76
    %v109 = vunpack.c.l.b16 %v77
    %v110 = vunpack.c.l.b16 %v78
    %v111 = vpack.c.b16 %v96, %v95
    %v112 = vpack.c.b16 %v98, %v97
    %v113 = vpack.c.b16 %v100, %v99
    %v114 = vpack.c.b16 %v102, %v101
    %v115 = vpack.c.b16 %v104, %v103
    %v116 = vpack.c.b16 %v106, %v105
    %v117 = vpack.c.b16 %v108, %v107
    %v118 = vpack.c.b16 %v110, %v109
    %127 = vmatprep.subr.bf16.mxu0 0
    %128 = vmatpush1.bf16.msra.mxu0 %v111
    %129 = vmatprep.subr.bf16.mxu0 0
    %130 = vmatpush1.bf16.msra.mxu0 %v112
    %131 = vmatprep.subr.bf16.mxu0 0
    %132 = vmatpush1.bf16.msra.mxu0 %v113
    %133 = vmatprep.subr.bf16.mxu0 0
    %134 = vmatpush1.bf16.msra.mxu0 %v114
    %135 = vmatprep.subr.bf16.mxu0 0
    %136 = vmatpush1.bf16.msra.mxu0 %v115
    %137 = vmatprep.subr.bf16.mxu0 0
    %138 = vmatpush1.bf16.msra.mxu0 %v116
    %139 = vmatprep.subr.bf16.mxu0 0
    %140 = vmatpush1.bf16.msra.mxu0 %v117
    %141 = vmatprep.subr.bf16.mxu0 0
    %142 = vmatpush1.bf16.msra.mxu0 %v118
    %143 = vmatprep.subr.bf16.mxu0 0
    %144 = vmatpush1.bf16.msra.mxu0 0
    %145 = vmatprep.subr.bf16.mxu0 0
    %146 = vmatpush1.bf16.msra.mxu0 0
    %147 = vmatprep.subr.bf16.mxu0 0
    %148 = vmatpush1.bf16.msra.mxu0 0
    %149 = vmatprep.subr.bf16.mxu0 0
    %150 = vmatpush1.bf16.msra.mxu0 0
    %151 = vmatprep.subr.bf16.mxu0 0
    %152 = vmatpush1.bf16.msra.mxu0 0
    %153 = vmatprep.subr.bf16.mxu0 0
    %154 = vmatpush1.bf16.msra.mxu0 0
    %155 = vmatprep.subr.bf16.mxu0 0
    %156 = vmatpush1.bf16.msra.mxu0 0
    %157 = vmatprep.subr.bf16.mxu0 0
    %158 = vmatpush1.bf16.msra.mxu0 0
    %159 = vmatprep.mubr.bf16.mxu0 0
    %160 = vmatmul.mubr.bf16.gmra.mrb[0].mxu0 %v62
    %v161 = vpop.f32.mrb[0].mxu0
    %v162 = vadd.f32 0.0, %v161
    %v163 = vpop.f32.mrb[0].mxu0
    %v164 = vpop.f32.mrb[0].mxu0
    %v165 = vpop.f32.mrb[0].mxu0
    %166 = vdwg.mxu0
    %v167 = vld [vmem:[%s2] sm:$0x1]
    %v168 = vlaneseq
    %v169 = vshrl.u32 %v168, 7
    %v170 = vsub.s32 0, %v169
    %v171 = vrot.slane %v167, %v170
    %v172 = vmul.f32 %v162, %v171
    %v173 = vld [vmem:[%s2 + $0x1] sm:$0x1]
    %v174 = vlaneseq
    %v175 = vshrl.u32 %v174, 7
    %v176 = vsub.s32 0, %v175
    %v177 = vrot.slane %v173, %v176
    %v178 = vadd.f32 %v172, %v177
    %v179 = vmax.f32 %v178, 0.0
    %v180 = vpack.c.bf16 %v179, %v179
    %v181 = vld [vmem:[#allocation7] sm:$0xff]
    %v182 = vld [vmem:[#allocation7 + $0x8] sm:$0xff]
    %v183 = vld [vmem:[#allocation7 + $0x10] sm:$0xff]
    %v184 = vld [vmem:[#allocation7 + $0x18] sm:$0xff]
    %v185 = vld [vmem:[#allocation7 + $0x20] sm:$0xff]
    %v186 = vld [vmem:[#allocation7 + $0x28] sm:$0xff]
    %v187 = vld [vmem:[#allocation7 + $0x30] sm:$0xff]
    %v188 = vld [vmem:[#allocation7 + $0x38] sm:$0xff]
    %v189 = vld [vmem:[#allocation7 + $0x40] sm:$0xff]
    %v190 = vld [vmem:[#allocation7 + $0x48] sm:$0xff]
    %v191 = vld [vmem:[#allocation7 + $0x50] sm:$0xff]
    %v192 = vld [vmem:[#allocation7 + $0x58] sm:$0xff]
    %v193 = vld [vmem:[#allocation7 + $0x60] sm:$0xff]
    %v194 = vld [vmem:[#allocation7 + $0x68] sm:$0xff]
    %v195 = vld [vmem:[#allocation7 + $0x70] sm:$0xff]
    %v196 = vld [vmem:[#allocation7 + $0x78] sm:$0xff]
    %v213 = vunpack.c.l.b16 %v181
    %v214 = vunpack.c.h.b16 %v181
    %v215 = vunpack.c.l.b16 %v182
    %v216 = vunpack.c.h.b16 %v182
    %v217 = vunpack.c.l.b16 %v183
    %v218 = vunpack.c.h.b16 %v183
    %v219 = vunpack.c.l.b16 %v184
    %v220 = vunpack.c.h.b16 %v184
    %v221 = vunpack.c.l.b16 %v185
    %v222 = vunpack.c.h.b16 %v185
    %v223 = vunpack.c.l.b16 %v186
    %v224 = vunpack.c.h.b16 %v186
    %v225 = vunpack.c.l.b16 %v187
    %v226 = vunpack.c.h.b16 %v187
    %v227 = vunpack.c.l.b16 %v188
    %v228 = vunpack.c.h.b16 %v188
    %v229 = vunpack.c.l.b16 %v189
    %v230 = vunpack.c.h.b16 %v189
    %v231 = vunpack.c.l.b16 %v190
    %v232 = vunpack.c.h.b16 %v190
    %v233 = vunpack.c.l.b16 %v191
    %v234 = vunpack.c.h.b16 %v191
    %v235 = vunpack.c.l.b16 %v192
    %v236 = vunpack.c.h.b16 %v192
    %v237 = vunpack.c.l.b16 %v193
    %v238 = vunpack.c.h.b16 %v193
    %v239 = vunpack.c.l.b16 %v194
    %v240 = vunpack.c.h.b16 %v194
    %v241 = vunpack.c.l.b16 %v195
    %v242 = vunpack.c.h.b16 %v195
    %v243 = vunpack.c.l.b16 %v196
    %v244 = vunpack.c.h.b16 %v196
    %v245 = vpack.c.b16 %v215, %v213
    %v246 = vpack.c.b16 %v216, %v214
    %v247 = vpack.c.b16 %v219, %v217
    %v248 = vpack.c.b16 %v220, %v218
    %v249 = vpack.c.b16 %v223, %v221
    %v250 = vpack.c.b16 %v224, %v222
    %v251 = vpack.c.b16 %v227, %v225
    %v252 = vpack.c.b16 %v228, %v226
    %v253 = vpack.c.b16 %v231, %v229
    %v254 = vpack.c.b16 %v232, %v230
    %v255 = vpack.c.b16 %v235, %v233
    %v256 = vpack.c.b16 %v236, %v234
    %v257 = vpack.c.b16 %v239, %v237
    %v258 = vpack.c.b16 %v240, %v238
    %v259 = vpack.c.b16 %v243, %v241
    %v260 = vpack.c.b16 %v244, %v242
    %277 = vmatprep.subr.bf16.mxu0 %v246
    %278 = vmatpush1.bf16.msra.mxu0 %v245
    %279 = vmatprep.subr.bf16.mxu0 %v248
    %280 = vmatpush1.bf16.msra.mxu0 %v247
    %281 = vmatprep.subr.bf16.mxu0 %v250
    %282 = vmatpush1.bf16.msra.mxu0 %v249
    %283 = vmatprep.subr.bf16.mxu0 %v252
    %284 = vmatpush1.bf16.msra.mxu0 %v251
    %285 = vmatprep.subr.bf16.mxu0 %v254
    %286 = vmatpush1.bf16.msra.mxu0 %v253
    %287 = vmatprep.subr.bf16.mxu0 %v256
    %288 = vmatpush1.bf16.msra.mxu0 %v255
    %289 = vmatprep.subr.bf16.mxu0 %v258
    %290 = vmatpush1.bf16.msra.mxu0 %v257
    %291 = vmatprep.subr.bf16.mxu0 %v260
    %292 = vmatpush1.bf16.msra.mxu0 %v259
    %293 = vmatprep.subr.bf16.mxu0 0
    %294 = vmatpush1.bf16.msra.mxu0 0
    %295 = vmatprep.subr.bf16.mxu0 0
    %296 = vmatpush1.bf16.msra.mxu0 0
    %297 = vmatprep.subr.bf16.mxu0 0
    %298 = vmatpush1.bf16.msra.mxu0 0
    %299 = vmatprep.subr.bf16.mxu0 0
    %300 = vmatpush1.bf16.msra.mxu0 0
    %301 = vmatprep.subr.bf16.mxu0 0
    %302 = vmatpush1.bf16.msra.mxu0 0
    %303 = vmatprep.subr.bf16.mxu0 0
    %304 = vmatpush1.bf16.msra.mxu0 0
    %305 = vmatprep.subr.bf16.mxu0 0
    %306 = vmatpush1.bf16.msra.mxu0 0
    %307 = vmatprep.subr.bf16.mxu0 0
    %308 = vmatpush1.bf16.msra.mxu0 0
    %309 = vmatprep.mubr.bf16.mxu0 0
    %310 = vmatmul.mubr.bf16.gmra.mrb[0].mxu0 %v180
    %v311 = vpop.f32.mrb[0].mxu0
    %v312 = vadd.f32 0.0, %v311
    %v313 = vpop.f32.mrb[0].mxu0
    %v314 = vadd.f32 0.0, %v313
    %v315 = vpop.f32.mrb[0].mxu0
    %v316 = vpop.f32.mrb[0].mxu0
    %317 = vdwg.mxu0
    %v318 = vld [vmem:[%s4] ss:$2 sm:$0x3]
    %v320 = vlaneseq
    %v321 = vshrl.u32 %v320, 7
    %v322 = vsub.s32 0, %v321
    %v323 = vrot.slane %v318, %v322
    %v324 = vlaneseq
    %v325 = vshrl.u32 %v324, 7
    %v326 = vsub.s32 1, %v325
    %v327 = vrot.slane %v318, %v326
    %v330 = vmul.f32 %v312, %v323
    %v331 = vmul.f32 %v314, %v327
    %s332 = scalar_lea.vmem %s4, 1
    %v333 = vld [vmem:[%s332] ss:$2 sm:$0x3]
    %v335 = vlaneseq
    %v336 = vshrl.u32 %v335, 7
    %v337 = vsub.s32 0, %v336
    %v338 = vrot.slane %v333, %v337
    %v339 = vlaneseq
    %v340 = vshrl.u32 %v339, 7
    %v341 = vsub.s32 1, %v340
    %v342 = vrot.slane %v333, %v341
    %v345 = vadd.f32 %v330, %v338
    %v346 = vadd.f32 %v331, %v342
    %v347 = vmax.f32 %v345, 0.0
    %v348 = vmax.f32 %v346, 0.0
    %349 = vst [vmem:[#allocation8] sm:$0xff] %v347
    %350 = vst [vmem:[#allocation8 + $0x8] sm:$0xff] %v348
    // Predicated region
    $region34: #{fingerprint_forward.1} parent=1 // pred_check
      _
    $region35: #{fingerprint_forward.1} parent=1 // pred_check_branch
      %352 = sbr.rel (0) target = $region37
    $region36: #{fingerprint_forward.1} parent=1 // pred_region
      %s354 = ssub.s32 256, 256
      %355 = vsyncadd [#allocation4], %s354
      %s357 = sshll.u32 [#allocation8], 4
      %s358 = int_to_ptr.vmem [resolvable:$true] %s357
      %360 = dma.vmem_to_hbm [thread:$0]  %s358, 256, %s5, [#allocation4]
    $region37: #{fingerprint_forward.1} parent=1 // pred_fallthru
      _
    // Predicated region
    $region38: #{fingerprint_forward.1} parent=1 // pred_check
      _
    $region39: #{fingerprint_forward.1} parent=1 // pred_check_branch
      %362 = sbr.rel (0) target = $region41
    $region40: #{fingerprint_forward.1} parent=1 // pred_region
      %363 = dma.done [#allocation4], 256
    $region41: #{fingerprint_forward.1} parent=1 // pred_fallthru
      _
    %364 = vsyncpa [#allocation3], 1
    %365 = vsyncpa [#allocation6], 1
    %366 = vsyncpa [#allocation4], 1

</llo_original>
